<compile_context>
chip_gen: v5e
topology: v5e:2x2
jax: 0.10.0
libtpu: 0.0.40
codegen_flags: <defaults>
</compile_context>

<pallas_src>
import functools

import jax
import jax.numpy as jnp
import numpy as np
from jax import lax
from jax.experimental import pallas as pl
from jax.experimental.pallas import tpu as pltpu


def _fused_matmul_kernel(w_ref, xf_ref, o_ref):
    """One lane-tile grid step: o = W @ X on the MXU.

    w_ref  : (ROWSp, KFp)    fused weight+bias matrix (grid-resident)
    xf_ref : (KFp, rc_blk)   im2col features (shifted views + ones row)
    o_ref  : (ROWSp, rc_blk) phase-major output tile (lane-dense)
    """
    o_ref[...] = jnp.dot(
        w_ref[...], xf_ref[...], preferred_element_type=jnp.float32
    ).astype(o_ref.dtype)


def _round_up(v, m):
    return -(-v // m) * m


def upsample_conv_layer(x_nchw, weight, bias, *, stride, padding=1,
                        mxu_dtype="auto"):
    """ConvTranspose2d(Cin, Cout, K, stride=stride, padding=padding) forward.

    x_nchw : (N, Cin, H, W)       float32
    weight : (Cin, Cout, KH, KW)  PyTorch ConvTranspose2d layout
    bias   : (Cout,)
    returns: (N, Cout, OH, OW), OH = (H-1)*stride - 2*padding + KH
    """
    N, Cin, H, W = x_nchw.shape
    wCin, Cout, KH, KW = weight.shape
    assert wCin == Cin and KH == KW, "square kernel expected"
    K, s, p = KH, stride, padding
    OH = (H - 1) * s - 2 * p + K
    OW = (W - 1) * s - 2 * p + K
    assert OH > 0 and OW > 0
    # TODO(synk): output_padding is not supported (matches the spec module).

    # ---- sub-pixel decomposition bookkeeping (all static Python) ----------
    # Output row oh = s*r + ph uses input rows ih = r + a with
    #   a = (ph + p - kh)/s   for taps kh with kh ≡ (ph + p) (mod s).
    A = sorted({(ph + p - k) // s
                for ph in range(s) for k in range(K)
                if (ph + p - k) % s == 0})
    nA = len(A)
    R = -(-OH // s)                              # per-phase rows (ceil)
    C = -(-OW // s)                              # per-phase cols
    RC = R * C
    L = N * RC                                   # batch folded into lanes

    # ---- dtype choice (bf16 MXU operands for scaled-up layers) ------------
    if mxu_dtype == "auto":
        mxu_dtype = jnp.bfloat16 if (nA * nA * Cin >= 128 or L >= 16384) else None
    in_dtype = np.dtype(mxu_dtype) if mxu_dtype is not None else np.dtype(x_nchw.dtype)
    in_bytes = in_dtype.itemsize
    sub_align = 16 if in_bytes < 4 else 8        # packed-row alignment for bf16

    KF = nA * nA * Cin + 1                       # +1 ones row: bias rides in matmul
    KFp = _round_up(KF, sub_align)
    ROWS = Cout * s * s
    ROWSp = _round_up(ROWS, 8)

    # ---- lane tiling from a VMEM byte budget -------------------------------
    if in_bytes < 4 and L >= 512:
        lane_align = 512
    elif L >= 256:
        lane_align = 256
    else:
        lane_align = 128
    VMEM_BYTE_BUDGET = 24 * 1024 * 1024          # double-buffered in+out tile
    bytes_per_lane = 2 * (KFp * in_bytes + ROWSp * 4)
    max_blk = max(lane_align,
                  (VMEM_BYTE_BUDGET // bytes_per_lane) // lane_align * lane_align)
    Lp = _round_up(L, lane_align)
    rc_blk = min(Lp, max_blk)
    n_rc = -(-Lp // rc_blk)
    if n_rc < 2 and Lp >= 2 * lane_align:        # keep both v7x TCs busy
        rc_blk = _round_up(-(-Lp // 2), lane_align)
        n_rc = -(-Lp // rc_blk)
    Lp = n_rc * rc_blk

    # ---- im2col over the nA^2 shifted views, batch folded into lanes ------
    # TODO(synk): for very large H*W*Cin, stream x from HBM inside the kernel
    # (memory_space=pl.ANY + per-shift accumulation) instead of materializing
    # the nA^2-times-larger xf.
    pad_lo = max(0, -A[0])
    pad_hi_r = max(0, (R - 1 + A[-1]) - (H - 1))
    pad_hi_c = max(0, (C - 1 + A[-1]) - (W - 1))
    xp = jnp.pad(x_nchw, ((0, 0), (0, 0),
                          (pad_lo, pad_hi_r), (pad_lo, pad_hi_c)))
    xt = jnp.transpose(xp, (1, 0, 2, 3))         # (Cin, N, Hp, Wp)

    views = []
    for a in A:
        for b in A:
            v = xt[:, :, a + pad_lo:a + pad_lo + R, b + pad_lo:b + pad_lo + C]
            views.append(v.reshape(Cin, L))
    views.append(jnp.ones((1, L), x_nchw.dtype))           # bias feature row
    if KFp > KF:
        views.append(jnp.zeros((KFp - KF, L), x_nchw.dtype))
    xf = jnp.concatenate(views, axis=0)                    # (KFp, L)
    if Lp > L:
        xf = jnp.pad(xf, ((0, 0), (0, Lp - L)))
    xf = xf.astype(in_dtype)

    # ---- fused weight+bias matrix via ONE gather (static numpy index map) -
    n_w = Cin * Cout * K * K
    zero_idx = n_w + Cout                                   # index of appended 0
    idx = np.full((ROWSp, KFp), zero_idx, dtype=np.int32)
    for co in range(Cout):
        for ph in range(s):
            for pw in range(s):
                r = (co * s + ph) * s + pw
                for ia, a in enumerate(A):
                    kh = ph + p - s * a
                    for ib, b in enumerate(A):
                        kw = pw + p - s * b
                        if 0 <= kh < K and 0 <= kw < K:
                            base = (ia * nA + ib) * Cin
                            for ci in range(Cin):
                                idx[r, base + ci] = (
                                    (ci * Cout + co) * K + kh) * K + kw
                idx[r, KF - 1] = n_w + co                   # bias[co]
    src = jnp.concatenate([weight.reshape(-1), bias,
                           jnp.zeros((1,), weight.dtype)])
    wmat = jnp.take(src, jnp.asarray(idx), axis=0).astype(in_dtype)  # (ROWSp,KFp)

    # ---- single pallas_call: grid over lane tiles only ---------------------
    need = 2 * rc_blk * (KFp * in_bytes + ROWSp * 4) + 2 * ROWSp * KFp * in_bytes
    vmem_limit = int(min(max(2 * need, 32 * 1024 * 1024), 64 * 1024 * 1024))
    cost = pl.CostEstimate(
        flops=2 * ROWSp * KFp * Lp,
        transcendentals=0,
        bytes_accessed=int(KFp * Lp * in_bytes + ROWSp * KFp * in_bytes
                           + ROWSp * Lp * 4))

    out_phase = pl.pallas_call(
        _fused_matmul_kernel,
        out_shape=jax.ShapeDtypeStruct((ROWSp, Lp), jnp.float32),
        grid=(n_rc,),
        in_specs=[
            pl.BlockSpec((ROWSp, KFp), lambda j: (0, 0)),    # resident weights
            pl.BlockSpec((KFp, rc_blk), lambda j: (0, j)),
        ],
        out_specs=pl.BlockSpec((ROWSp, rc_blk), lambda j: (0, j)),
        compiler_params=pltpu.CompilerParams(
            dimension_semantics=("parallel",),
            vmem_limit_bytes=vmem_limit),
        cost_estimate=cost,
    )(wmat, xf)

    # ---- sub-pixel interleave + crop (tiny, fused XLA reshape/transpose) ---
    y = out_phase[:ROWS, :L].reshape(Cout, s, s, N, R, C)   # (co, ph, pw, n, r, c)
    y = jnp.transpose(y, (3, 0, 4, 1, 5, 2))                # (n, co, r, ph, c, pw)
    y = y.reshape(N, Cout, R * s, C * s)
    return y[:, :, :OH, :OW]


if __name__ == "__main__":
    # UpsampleConvLayer(in_channels=4, out_channels=4, kernel_size=3, stride=2)
    N, Cin, Cout, H, W = 2, 4, 4, 16, 16
    K, STRIDE, PAD = 3, 2, 1

    key = jax.random.PRNGKey(0)
    kx, kw, kb = jax.random.split(key, 3)
    x = jax.random.normal(kx, (N, Cin, H, W), jnp.float32)
    weight = jax.random.normal(kw, (Cin, Cout, K, K), jnp.float32) * 0.1
    bias = jax.random.normal(kb, (Cout,), jnp.float32) * 0.1

    fwd = jax.jit(functools.partial(upsample_conv_layer,
                                    stride=STRIDE, padding=PAD))
    out = jax.block_until_ready(fwd(x, weight, bias))

    # Pure-JAX reference for ConvTranspose2d semantics.
    x_nhwc = jnp.transpose(x, (0, 2, 3, 1))
    w_hwio = jnp.transpose(weight[:, :, ::-1, ::-1], (2, 3, 0, 1))
    ref_nhwc = lax.conv_general_dilated(
        x_nhwc, w_hwio, window_strides=(1, 1),
        padding=[(K - 1 - PAD, K - 1 - PAD)] * 2,
        lhs_dilation=(STRIDE, STRIDE),
        dimension_numbers=("NHWC", "HWIO", "NHWC")) + bias
    ref = jnp.transpose(ref_nhwc, (0, 3, 1, 2))

    OH = (H - 1) * STRIDE - 2 * PAD + K
    OW = (W - 1) * STRIDE - 2 * PAD + K
    np.testing.assert_allclose(np.asarray(out), np.asarray(ref),
                               rtol=1e-4, atol=1e-4)
    assert out.shape == (N, Cout, OH, OW)
    print("KERNEL_OK")
</pallas_src>

<mosaic_0001>
module attributes {stable_mosaic.version = 11 : i64} {
  func.func @_fused_matmul_kernel(%arg0: i32, %arg1: memref<16x24xf32, #tpu.memory_space<vmem>>, %arg2: memref<24x256xf32, #tpu.memory_space<vmem>>, %arg3: memref<16x256xf32, #tpu.memory_space<vmem>>) attributes {dimension_semantics = [#tpu.dimension_semantics<parallel>], iteration_bounds = array<i64: 2>, scalar_prefetch = 0 : i64, scratch_operands = 0 : i64, tpu.core_type = #tpu.core_type<tc>, window_params = [{pipeline_mode = #tpu.pipeline_mode<synchronous>, transform_indices = @transform_0, window_bounds = array<i64: 16, 24>}, {transform_indices = @transform_1, window_bounds = array<i64: 24, 256>}, {transform_indices = @transform_2, window_bounds = array<i64: 16, 256>}]} {
    %c0 = arith.constant 0 : index
    %c0_0 = arith.constant 0 : index
    %0 = vector.load %arg1[%c0, %c0_0] : memref<16x24xf32, #tpu.memory_space<vmem>>, vector<16x24xf32>
    %c0_1 = arith.constant 0 : index
    %c0_2 = arith.constant 0 : index
    %1 = vector.load %arg2[%c0_1, %c0_2] : memref<24x256xf32, #tpu.memory_space<vmem>>, vector<24x256xf32>
    %cst = arith.constant dense<0.000000e+00> : vector<16x256xf32>
    %2 = tpu.matmul %0, %1, %cst {dimension_numbers = #tpu.dot_dimension_numbers<[1], [0], [0], [1], [0, 0, 1, 1], [], []>} : vector<16x24xf32>, vector<24x256xf32>, vector<16x256xf32> -> vector<16x256xf32>
    %c0_3 = arith.constant 0 : index
    %c0_4 = arith.constant 0 : index
    %3 = vector.load %arg3[%c0_3, %c0_4] : memref<16x256xf32, #tpu.memory_space<vmem>>, vector<16x256xf32>
    tpu.vector_store %arg3[%c0_3, %c0_4], %2 {strides = array<i32>} : memref<16x256xf32, #tpu.memory_space<vmem>>, vector<16x256xf32>,
    return
  }
  func.func @transform_0(%arg0: i32) -> (i32, i32) {
    %c0_i32 = arith.constant 0 : i32
    %c0_i32_0 = arith.constant 0 : i32
    %c0_i32_1 = arith.constant 0 : i32
    return %c0_i32, %c0_i32_0 : i32, i32
  }
  func.func @transform_1(%arg0: i32) -> (i32, i32) {
    %c0_i32 = arith.constant 0 : i32
    %c0_i32_0 = arith.constant 0 : i32
    return %c0_i32, %arg0 : i32, i32
  }
  func.func @transform_2(%arg0: i32) -> (i32, i32) {
    %c0_i32 = arith.constant 0 : i32
    %c0_i32_0 = arith.constant 0 : i32
    return %c0_i32, %arg0 : i32, i32
  }
}

</mosaic_0001>

<llo_original>
// kernel: upsample_conv_layer.1
$region0: #{upsample_conv_layer.1}
  #allocation0 [shape = 'u32[]', space=smem, size = 0x4, offset = 0x4, fixed_abs, tag = 'smem constant byte address 0x4 - core index']
  #allocation1 [shape = 'u32[72,128]{1,0:T(1,128)}', space=vmem, size = 0x9000, scoped, tag = 'internal scratch']
  %s0 = inlined_call_operand.vmem [shape: f32[16,24], index: 0, kind: input, shape index: {}]
  %s1 = inlined_call_operand.vmem [shape: f32[24,512], index: 1, kind: input, shape index: {}]
  %s2 = inlined_call_operand.vmem [shape: f32[16,512], index: 2, kind: output, shape index: {}]
  %s3 = sld [smem:[#allocation0]]
  $region83: #{upsample_conv_layer.1} parent=0
    _
  %s5 = ssub.s32 1, %s3
  %s6 = scalar_select 0, %s5, %s3
  $region1: #{upsample_conv_layer.1} parent=0
    #allocation2 [shape = 'u8[49152]{0}', space=vmem, size = 0xc000, scoped, tag = 'input window, operand 1']
    #allocation3 [shape = 'u8[32768]{0}', space=vmem, size = 0x8000, scoped, tag = 'output window, operand 0']
    loop: start=0, step=1, limit=4
    $region2: #{upsample_conv_layer.1} parent=1 // loop_pre_header
      _
    $region3: #{upsample_conv_layer.1} parent=1 // loop_header
      %s8 = sphi 0, %s12
      %p9 = scmp.ge.s32.totalorder %s8, 4
      %s16 = sphi 0, %s16
      %s18 = sphi 0, %s16
      %s19 = sphi 0, %s18
      %s33 = sphi 0, %s19
      %s39 = sphi 0, %s41
      %s42 = sphi 0, %s39
      %s43 = sphi 0, %s42
      %s59 = sphi 0, %s43
      %s65 = sphi 0, %s67
      %s68 = sphi 0, %s65
      %s69 = sphi 0, %s68
      %s85 = sphi 0, %s69
    $region4: #{upsample_conv_layer.1} parent=1 // loop_header_branch
      %11 = sbr.rel (%p9) target = $region8
    $region5: #{upsample_conv_layer.1} parent=1 // loop_body
      %s13 = ssub.s32 %s8, 1
      %s14 = ssub.s32 %s8, 2
      %s15 = sadd.s32 %s8, 1
      %s17 = sadd.s32 %s16, 1
      %p20 = scmp.eq.s32.totalorder %s8, 1
      %p21 = scmp.ne.s32.totalorder %s16, %s18
      %p22 = scmp.eq.s32.totalorder %s8, 0
      %p23 = por %p21, %p22
      %p24 = scmp.ne.s32.totalorder %s16, %s18
      %p25 = scmp.eq.s32.totalorder %s13, 1
      %p26 = por %p24, %p25
      %p27 = scmp.ne.s32.totalorder %s18, %s19
      %p28 = scmp.eq.s32.totalorder %s13, 0
      %p29 = por %p27, %p28
      %p30 = scmp.ne.s32.totalorder %s18, %s19
      %p31 = scmp.eq.s32.totalorder %s14, 1
      %p32 = por %p30, %p31
      %p34 = scmp.ne.s32.totalorder %s19, %s33
      %p35 = scmp.eq.s32.totalorder %s14, 0
      %p36 = por %p34, %p35
      %s37 = ssub.s32 %s8, %s15
      %p38 = scmp.eq.s32.totalorder %s37, 0
      %s40 = sadd.s32 %s39, 1
      %s41 = scalar_select %p38, %s39, %s40
      %p44 = pneg %p38
      %p45 = scmp.eq.s32.totalorder %s8, 1
      %p46 = por %p44, %p45
      %p47 = scmp.ne.s32.totalorder %s39, %s42
      %p48 = scmp.eq.s32.totalorder %s8, 0
      %p49 = por %p47, %p48
      %p50 = scmp.ne.s32.totalorder %s39, %s42
      %p51 = scmp.eq.s32.totalorder %s13, 1
      %p52 = por %p50, %p51
      %p53 = scmp.ne.s32.totalorder %s42, %s43
      %p54 = scmp.eq.s32.totalorder %s13, 0
      %p55 = por %p53, %p54
      %p56 = scmp.ne.s32.totalorder %s42, %s43
      %p57 = scmp.eq.s32.totalorder %s14, 1
      %p58 = por %p56, %p57
      %p60 = scmp.ne.s32.totalorder %s43, %s59
      %p61 = scmp.eq.s32.totalorder %s14, 0
      %p62 = por %p60, %p61
      %s63 = ssub.s32 %s8, %s15
      %p64 = scmp.eq.s32.totalorder %s63, 0
      %s66 = sadd.s32 %s65, 1
      %s67 = scalar_select %p64, %s65, %s66
      %p70 = pneg %p64
      %p71 = scmp.eq.s32.totalorder %s8, 1
      %p72 = por %p70, %p71
      %p73 = scmp.ne.s32.totalorder %s65, %s68
      %p74 = scmp.eq.s32.totalorder %s8, 0
      %p75 = por %p73, %p74
      %p76 = scmp.ne.s32.totalorder %s65, %s68
      %p77 = scmp.eq.s32.totalorder %s13, 1
      %p78 = por %p76, %p77
      %p79 = scmp.ne.s32.totalorder %s68, %s69
      %p80 = scmp.eq.s32.totalorder %s13, 0
      %p81 = por %p79, %p80
      %p82 = scmp.ne.s32.totalorder %s68, %s69
      %p83 = scmp.eq.s32.totalorder %s14, 1
      %p84 = por %p82, %p83
      %p86 = scmp.ne.s32.totalorder %s69, %s85
      %p87 = scmp.eq.s32.totalorder %s14, 0
      %p88 = por %p86, %p87
      %p89 = scmp.le.s32.totalorder 1, %s8
      %p90 = scmp.lt.s32.totalorder %s8, 3
      %p91 = pnand %p89, %p90
      %p92 = pneg %p91
      // Predicated region
      $region9: #{upsample_conv_layer.1} parent=5 // pred_check
        _
      $region10: #{upsample_conv_layer.1} parent=5 // pred_check_branch
        %94 = sbr.rel (%p91) target = $region12
      $region11: #{upsample_conv_layer.1} parent=5 // pred_region
        %s95 = ssub.s32 %s8, 1
        // Predicated region
        $region13: #{upsample_conv_layer.1} parent=11 // pred_check
          %p96 = pneg %p29
        $region14: #{upsample_conv_layer.1} parent=11 // pred_check_branch
          %98 = sbr.rel (%p96) target = $region16
        $region15: #{upsample_conv_layer.1} parent=11 // pred_region
          _
        $region16: #{upsample_conv_layer.1} parent=11 // pred_fallthru
          _
      $region12: #{upsample_conv_layer.1} parent=5 // pred_fallthru
        _
      %p99 = scmp.lt.s32.totalorder %s8, 2
      // Predicated region
      $region17: #{upsample_conv_layer.1} parent=5 // pred_check
        %p100 = pneg %p99
      $region18: #{upsample_conv_layer.1} parent=5 // pred_check_branch
        %102 = sbr.rel (%p100) target = $region20
      $region19: #{upsample_conv_layer.1} parent=5 // pred_region
        // Predicated region
        $region21: #{upsample_conv_layer.1} parent=19 // pred_check
          %p103 = pneg %p49
        $region22: #{upsample_conv_layer.1} parent=19 // pred_check_branch
          %105 = sbr.rel (%p103) target = $region24
        $region23: #{upsample_conv_layer.1} parent=19 // pred_region
          %s106 = sand.u32 %s39, 1
          %s107 = sand.u32 %s39, 1
          %s108 = smul.addr %s107, 48
          %s109 = scalar_lea.vmem [#allocation2], %s108
          %s110 = smul.u32 2, %s8
          %s111 = smul.addr %s110, 8
          %s112 = scalar_lea.vmem %s1, %s111
          // Predicated region
          $region25: #{upsample_conv_layer.1} parent=23 // pred_check
            _
          $region26: #{upsample_conv_layer.1} parent=23 // pred_check_branch
            %114 = sbr.rel (0) target = $region28
          $region27: #{upsample_conv_layer.1} parent=23 // pred_region
            // Predicated region
            $region29: #{upsample_conv_layer.1} parent=27 // pred_check
              _
            $region30: #{upsample_conv_layer.1} parent=27 // pred_check_branch
              %116 = sbr.rel (0) target = $region32
            $region31: #{upsample_conv_layer.1} parent=27 // pred_region
              loop: start=0, step=1, limit=1
              $region33: #{upsample_conv_layer.1} parent=31 // loop_pre_header
                _
              $region34: #{upsample_conv_layer.1} parent=31 // loop_header
                %s118 = sphi 0, %s122
                %p119 = scmp.ge.s32.totalorder %s118, 1
                %s123 = sphi %s112, %s112
                %s124 = sphi %s109, %s109
              $region35: #{upsample_conv_layer.1} parent=31 // loop_header_branch
                %121 = sbr.rel (%p119) target = $region39
              $region36: #{upsample_conv_layer.1} parent=31 // loop_body
                %v125 = vld [vmem:[%s123] sm:$0xff]
                %126 = vst [vmem:[%s124] sm:$0xff] %v125
                %v127 = vld [vmem:[%s123 + $0x8] sm:$0xff]
                %128 = vst [vmem:[%s124 + $0x8] sm:$0xff] %v127
                %v129 = vld [vmem:[%s123 + $0x20] sm:$0xff]
                %130 = vst [vmem:[%s124 + $0x10] sm:$0xff] %v129
                %v131 = vld [vmem:[%s123 + $0x28] sm:$0xff]
                %132 = vst [vmem:[%s124 + $0x18] sm:$0xff] %v131
                %v133 = vld [vmem:[%s123 + $0x40] sm:$0xff]
                %134 = vst [vmem:[%s124 + $0x20] sm:$0xff] %v133
                %v135 = vld [vmem:[%s123 + $0x48] sm:$0xff]
                %136 = vst [vmem:[%s124 + $0x28] sm:$0xff] %v135
              $region37: #{upsample_conv_layer.1} parent=31 // loop_footer
                %s122 = sadd.s32 1, %s118
              $region38: #{upsample_conv_layer.1} parent=31 // loop_footer_branch
                %117 = sbr.rel target = $region34
              $region39: #{upsample_conv_layer.1} parent=31 // loop_exit
                _
            $region32: #{upsample_conv_layer.1} parent=27 // pred_fallthru
              _
            // Predicated region
            $region40: #{upsample_conv_layer.1} parent=27 // pred_check
              _
            $region41: #{upsample_conv_layer.1} parent=27 // pred_check_branch
              %138 = sbr.rel target = $region43
            $region42: #{upsample_conv_layer.1} parent=27 // pred_region
              _
            $region43: #{upsample_conv_layer.1} parent=27 // pred_fallthru
              _
          $region28: #{upsample_conv_layer.1} parent=23 // pred_fallthru
            _
          %139 = vnop
        $region24: #{upsample_conv_layer.1} parent=19 // pred_fallthru
          _
      $region20: #{upsample_conv_layer.1} parent=5 // pred_fallthru
        _
      %p140 = scmp.le.s32.totalorder 1, %s8
      %p141 = scmp.lt.s32.totalorder %s8, 3
      %p142 = pnand %p140, %p141
      %p143 = pneg %p142
      // Predicated region
      $region44: #{upsample_conv_layer.1} parent=5 // pred_check
        _
      $region45: #{upsample_conv_layer.1} parent=5 // pred_check_branch
        %145 = sbr.rel (%p142) target = $region47
      $region46: #{upsample_conv_layer.1} parent=5 // pred_region
        %s146 = ssub.s32 %s8, 1
        %s147 = sand.u32 %s42, 1
        %s148 = sand.u32 %s42, 1
        %s149 = smul.addr %s148, 48
        %s150 = scalar_lea.vmem [#allocation2], %s149
        // Predicated region
        $region48: #{upsample_conv_layer.1} parent=46 // pred_check
          %p151 = pneg %p55
        $region49: #{upsample_conv_layer.1} parent=46 // pred_check_branch
          %153 = sbr.rel (%p151) target = $region51
        $region50: #{upsample_conv_layer.1} parent=46 // pred_region
          _
        $region51: #{upsample_conv_layer.1} parent=46 // pred_fallthru
          _
        %p154 = pneg %p29
        %p155 = pneg %p26
        %s156 = sand.u32 %s42, 1
        %s157 = sand.u32 %s42, 1
        %s158 = smul.addr %s157, 48
        %s159 = scalar_lea.vmem [#allocation2], %s158
        %p160 = pneg %p55
        %p161 = pneg %p52
        %p162 = pneg %p81
        %p163 = pneg %p78
        %s164 = sand.u32 %s68, 1
        %s165 = sand.u32 %s68, 1
        %s166 = smul.addr %s165, 32
        %s167 = scalar_lea.vmem [#allocation3], %s166
        %s168 = smul.u32 2, %s13
        %s169 = smul.u32 2, %s13
        %v170 = vld [vmem:[%s0] sm:$0xff]
        %v171 = vld [vmem:[%s0 + $0x8] sm:$0xff]
        %v172 = vld [vmem:[%s150] sm:$0xff]
        %v173 = vld [vmem:[%s150 + $0x8] sm:$0xff]
        %v174 = vld [vmem:[%s150 + $0x10] sm:$0xff]
        %v175 = vld [vmem:[%s150 + $0x18] sm:$0xff]
        %v176 = vld [vmem:[%s150 + $0x20] sm:$0xff]
        %v177 = vld [vmem:[%s150 + $0x28] sm:$0xff]
        %vm178 = vcmask 195584
        %v180 = vsel %vm178, %v170, 0
        %v183 = vsel %vm178, %v171, 0
        %185 = vmatpush.msra.mxu0 0.0
        %186 = vmatpush.msra.mxu0 0.0
        %187 = vmatpush.msra.mxu0 0.0
        %188 = vmatpush.msra.mxu0 0.0
        %189 = vmatpush.msra.mxu0 0.0
        %190 = vmatpush.msra.mxu0 0.0
        %191 = vmatpush.msra.mxu0 0.0
        %192 = vmatpush.msra.mxu0 0.0
        %193 = vmatpush.msra.mxu0 0.0
        %194 = vmatpush.msra.mxu0 0.0
        %195 = vmatpush.msra.mxu0 0.0
        %196 = vmatpush.msra.mxu0 0.0
        %197 = vmatpush.msra.mxu0 0.0
        %198 = vmatpush.msra.mxu0 %v176
        %199 = vmatpush.msra.mxu0 %v174
        %200 = vmatpush.msra.mxu0 %v172
        %201 = vmatmul.f32.gmra.mxu0 %v180
        %v202 = vpop.f32.mrf.mxu0
        %v203 = vadd.f32 0.0, %v202
        %204 = vmatmul.f32.gmra.mxu0 %v183
        %v205 = vpop.f32.mrf.mxu0
        %v206 = vadd.f32 0.0, %v205
        %207 = vdwg.mxu0
        %208 = vmatpush.msra.mxu0 0.0
        %209 = vmatpush.msra.mxu0 0.0
        %210 = vmatpush.msra.mxu0 0.0
        %211 = vmatpush.msra.mxu0 0.0
        %212 = vmatpush.msra.mxu0 0.0
        %213 = vmatpush.msra.mxu0 0.0
        %214 = vmatpush.msra.mxu0 0.0
        %215 = vmatpush.msra.mxu0 0.0
        %216 = vmatpush.msra.mxu0 0.0
        %217 = vmatpush.msra.mxu0 0.0
        %218 = vmatpush.msra.mxu0 0.0
        %219 = vmatpush.msra.mxu0 0.0
        %220 = vmatpush.msra.mxu0 0.0
        %221 = vmatpush.msra.mxu0 %v177
        %222 = vmatpush.msra.mxu0 %v175
        %223 = vmatpush.msra.mxu0 %v173
        %224 = vmatmul.f32.gmra.mxu0 %v180
        %v225 = vpop.f32.mrf.mxu0
        %v226 = vadd.f32 0.0, %v225
        %227 = vmatmul.f32.gmra.mxu0 %v183
        %v228 = vpop.f32.mrf.mxu0
        %v229 = vadd.f32 0.0, %v228
        %230 = vdwg.mxu0
        %231 = vst [vmem:[%s167] sm:$0xff] %v203
        %232 = vst [vmem:[%s167 + $0x8] sm:$0xff] %v226
        %233 = vst [vmem:[%s167 + $0x10] sm:$0xff] %v206
        %234 = vst [vmem:[%s167 + $0x18] sm:$0xff] %v229
        %s235 = sand.u32 %s68, 1
        %s236 = sand.u32 %s68, 1
        %s237 = smul.addr %s236, 32
        %s238 = scalar_lea.vmem [#allocation3], %s237
        // Predicated region
        $region52: #{upsample_conv_layer.1} parent=46 // pred_check
          %p239 = pneg %p78
        $region53: #{upsample_conv_layer.1} parent=46 // pred_check_branch
          %241 = sbr.rel (%p239) target = $region55
        $region54: #{upsample_conv_layer.1} parent=46 // pred_region
          %s242 = smul.u32 2, %s13
          %s243 = smul.addr %s242, 8
          %s244 = scalar_lea.vmem %s2, %s243
          // Predicated region
          $region56: #{upsample_conv_layer.1} parent=54 // pred_check
            _
          $region57: #{upsample_conv_layer.1} parent=54 // pred_check_branch
            %246 = sbr.rel (0) target = $region59
          $region58: #{upsample_conv_layer.1} parent=54 // pred_region
            // Predicated region
            $region60: #{upsample_conv_layer.1} parent=58 // pred_check
              _
            $region61: #{upsample_conv_layer.1} parent=58 // pred_check_branch
              %248 = sbr.rel (0) target = $region63
            $region62: #{upsample_conv_layer.1} parent=58 // pred_region
              loop: start=0, step=1, limit=1
              $region64: #{upsample_conv_layer.1} parent=62 // loop_pre_header
                _
              $region65: #{upsample_conv_layer.1} parent=62 // loop_header
                %s250 = sphi 0, %s254
                %p251 = scmp.ge.s32.totalorder %s250, 1
                %s255 = sphi %s238, %s238
                %s256 = sphi %s244, %s244
              $region66: #{upsample_conv_layer.1} parent=62 // loop_header_branch
                %253 = sbr.rel (%p251) target = $region70
              $region67: #{upsample_conv_layer.1} parent=62 // loop_body
                %v257 = vld [vmem:[%s255] sm:$0xff]
                %258 = vst [vmem:[%s256] sm:$0xff] %v257
                %v259 = vld [vmem:[%s255 + $0x8] sm:$0xff]
                %260 = vst [vmem:[%s256 + $0x8] sm:$0xff] %v259
                %v261 = vld [vmem:[%s255 + $0x10] sm:$0xff]
                %262 = vst [vmem:[%s256 + $0x20] sm:$0xff] %v261
                %v263 = vld [vmem:[%s255 + $0x18] sm:$0xff]
                %264 = vst [vmem:[%s256 + $0x28] sm:$0xff] %v263
              $region68: #{upsample_conv_layer.1} parent=62 // loop_footer
                %s254 = sadd.s32 1, %s250
              $region69: #{upsample_conv_layer.1} parent=62 // loop_footer_branch
                %249 = sbr.rel target = $region65
              $region70: #{upsample_conv_layer.1} parent=62 // loop_exit
                _
            $region63: #{upsample_conv_layer.1} parent=58 // pred_fallthru
              _
            // Predicated region
            $region71: #{upsample_conv_layer.1} parent=58 // pred_check
              _
            $region72: #{upsample_conv_layer.1} parent=58 // pred_check_branch
              %266 = sbr.rel target = $region74
            $region73: #{upsample_conv_layer.1} parent=58 // pred_region
              _
            $region74: #{upsample_conv_layer.1} parent=58 // pred_fallthru
              _
          $region59: #{upsample_conv_layer.1} parent=54 // pred_fallthru
            _
          %267 = vnop
        $region55: #{upsample_conv_layer.1} parent=46 // pred_fallthru
          _
      $region47: #{upsample_conv_layer.1} parent=5 // pred_fallthru
        _
      %p268 = scmp.le.s32.totalorder 2, %s8
      // Predicated region
      $region75: #{upsample_conv_layer.1} parent=5 // pred_check
        %p269 = pneg %p268
      $region76: #{upsample_conv_layer.1} parent=5 // pred_check_branch
        %271 = sbr.rel (%p269) target = $region78
      $region77: #{upsample_conv_layer.1} parent=5 // pred_region
        %s272 = ssub.s32 %s8, 2
        // Predicated region
        $region79: #{upsample_conv_layer.1} parent=77 // pred_check
          %p273 = pneg %p84
        $region80: #{upsample_conv_layer.1} parent=77 // pred_check_branch
          %275 = sbr.rel (%p273) target = $region82
        $region81: #{upsample_conv_layer.1} parent=77 // pred_region
          %s276 = sand.u32 %s69, 1
          %s277 = sand.u32 %s69, 1
          %s278 = smul.addr %s277, 32
          %s279 = scalar_lea.vmem [#allocation3], %s278
        $region82: #{upsample_conv_layer.1} parent=77 // pred_fallthru
          _
      $region78: #{upsample_conv_layer.1} parent=5 // pred_fallthru
        _
    $region6: #{upsample_conv_layer.1} parent=1 // loop_footer
      %s12 = sadd.s32 1, %s8
    $region7: #{upsample_conv_layer.1} parent=1 // loop_footer_branch
      %7 = sbr.rel target = $region3
    $region8: #{upsample_conv_layer.1} parent=1 // loop_exit
      _

</llo_original>
